<compile_context>
chip_gen: v5e
topology: v5e:2x2
jax: 0.10.0
libtpu: 0.0.40
codegen_flags: <defaults>
</compile_context>

<pallas_src>
import jax
import jax.numpy as jnp
from jax.experimental import pallas as pl
from jax.experimental.pallas import tpu as pltpu

LANE = 128


def vnet_kernel(x_ref, w1_ref, b1_ref, w2_ref, b2_ref, out_ref):
    # fc1 on the MXU: K = raw input_dim (unpadded); Mosaic zero-fills the MXU
    # operand internally, so we never pay DMA bytes for K padded to 128 lanes.
    h = jnp.dot(x_ref[...], w1_ref[...], preferred_element_type=jnp.float32)
    # bias + ReLU on the VPU (padded hidden lanes have b1 == 0, so they stay 0).
    h = jnp.maximum(h + b1_ref[...], 0.0)
    # fc2 (output width 1): elementwise multiply + lane reduction (VPU/XLU)
    # instead of a degenerate N=1 MXU matmul. Padded w2 lanes are 0 -> inert.
    v = jnp.sum(h * w2_ref[...], axis=-1, keepdims=True) + b2_ref[...]
    # Store the real (block_b, 1) result directly: the output is tiny, so a small
    # masked vst beats a 128x lane-replicated writeback plus a wrapper slice.
    out_ref[...] = v


def prepare_vnet_params(w1, b1, w2, b2):
    """One-time weight layout prep (hoisted out of the per-call forward).

    Pads the hidden dim to a multiple of 128 lanes (zero padding is
    mathematically inert) and reshapes biases / w2 into 2-D row layouts.
    Call once; reuse the result for every forward call.
    """
    in_dim, hid = w1.shape
    hid_p = pl.cdiv(hid, LANE) * LANE
    w1_p = jnp.zeros((in_dim, hid_p), jnp.float32).at[:, :hid].set(
        w1.astype(jnp.float32))
    b1_p = jnp.zeros((1, hid_p), jnp.float32).at[:, :hid].set(
        jnp.reshape(b1, (1, hid)).astype(jnp.float32))
    w2_row = jnp.zeros((1, hid_p), jnp.float32).at[:, :hid].set(
        jnp.reshape(w2, (1, hid)).astype(jnp.float32))
    b2_p = jnp.reshape(jnp.asarray(b2, jnp.float32), (1, 1))
    return w1_p, b1_p, w2_row, b2_p


def vnet_forward(x, params, *, block_b=512):
    """x: (B, input_dim) f32, params from prepare_vnet_params -> (B, 1) f32."""
    w1_p, b1_p, w2_row, b2_p = params
    B, in_dim = x.shape
    hid_p = w1_p.shape[1]

    # Batch tile: a single grid step for small batches (per-step overhead would
    # dominate otherwise); 512-row tiles for large batches so the "parallel"
    # batch axis can split across the two TensorCores on v7x.
    tb = min(block_b, pl.cdiv(B, 8) * 8)
    b_pad = pl.cdiv(B, tb) * tb

    x = x.astype(jnp.float32)
    if b_pad != B:
        x = jnp.pad(x, ((0, b_pad - B), (0, 0)))

    out = pl.pallas_call(
        vnet_kernel,
        out_shape=jax.ShapeDtypeStruct((b_pad, 1), jnp.float32),
        grid=(b_pad // tb,),
        in_specs=[
            # x: tiled over the batch; last block dim == full array dim (no K pad).
            pl.BlockSpec((tb, in_dim), lambda i: (i, 0)),
            # Weights / biases: constant index_map -> stay VMEM-resident.
            pl.BlockSpec((in_dim, hid_p), lambda i: (0, 0)),
            pl.BlockSpec((1, hid_p), lambda i: (0, 0)),
            pl.BlockSpec((1, hid_p), lambda i: (0, 0)),
            pl.BlockSpec((1, 1), lambda i: (0, 0)),
        ],
        out_specs=pl.BlockSpec((tb, 1), lambda i: (i, 0)),
        compiler_params=pltpu.CompilerParams(
            dimension_semantics=("parallel",)),
    )(x, w1_p, b1_p, w2_row, b2_p)

    return out if b_pad == B else out[:B]


def init_vnet_params(key, input_dim, hidden_dim):
    """Deterministic init mimicking torch.nn.Linear default U(-1/sqrt(fan_in), +)."""
    k1, k2, k3, k4 = jax.random.split(key, 4)
    bound1 = 1.0 / jnp.sqrt(input_dim)
    bound2 = 1.0 / jnp.sqrt(hidden_dim)
    w1 = jax.random.uniform(k1, (input_dim, hidden_dim), jnp.float32, -bound1, bound1)
    b1 = jax.random.uniform(k2, (1, hidden_dim), jnp.float32, -bound1, bound1)
    w2 = jax.random.uniform(k3, (hidden_dim, 1), jnp.float32, -bound2, bound2)
    b2 = jax.random.uniform(k4, (1, 1), jnp.float32, -bound2, bound2)
    return w1, b1, w2, b2


if __name__ == "__main__":
    # CartPole-v0: observation dim = 4, hidden = 32. Batch of 256 env states.
    batch, input_dim, hidden_dim = 256, 4, 32

    key = jax.random.PRNGKey(0)
    kx, kp = jax.random.split(key)
    x = jax.random.normal(kx, (batch, input_dim), jnp.float32)
    w1, b1, w2, b2 = init_vnet_params(kp, input_dim, hidden_dim)

    # Weight prep happens ONCE (hoisted); the per-step forward only moves x.
    params = prepare_vnet_params(w1, b1, w2, b2)
    fwd = jax.jit(vnet_forward)

    out = jax.block_until_ready(fwd(x, params))
    assert out.shape == (batch, 1)

    # f32 end-to-end now -> tight tolerance vs the PyTorch-semantics reference.
    ref = jnp.maximum(x @ w1 + b1, 0.0) @ w2 + b2
    assert jnp.allclose(out, ref, atol=1e-4, rtol=1e-4), "mismatch vs f32 reference"

    print("KERNEL_OK")
</pallas_src>

<mosaic_0001>
module attributes {stable_mosaic.version = 11 : i64} {
  func.func @vnet_kernel(%arg0: i32, %arg1: memref<256x4xf32, #tpu.memory_space<vmem>>, %arg2: memref<4x128xf32, #tpu.memory_space<vmem>>, %arg3: memref<1x128xf32, #tpu.memory_space<vmem>>, %arg4: memref<1x128xf32, #tpu.memory_space<vmem>>, %arg5: memref<1x1xf32, #tpu.memory_space<vmem>>, %arg6: memref<256x1xf32, #tpu.memory_space<vmem>>) attributes {dimension_semantics = [#tpu.dimension_semantics<parallel>], iteration_bounds = array<i64: 1>, scalar_prefetch = 0 : i64, scratch_operands = 0 : i64, tpu.core_type = #tpu.core_type<tc>, window_params = [{transform_indices = @transform_0, window_bounds = array<i64: 256, 4>}, {pipeline_mode = #tpu.pipeline_mode<synchronous>, transform_indices = @transform_1, window_bounds = array<i64: 4, 128>}, {pipeline_mode = #tpu.pipeline_mode<synchronous>, transform_indices = @transform_2, window_bounds = array<i64: 1, 128>}, {pipeline_mode = #tpu.pipeline_mode<synchronous>, transform_indices = @transform_3, window_bounds = array<i64: 1, 128>}, {pipeline_mode = #tpu.pipeline_mode<synchronous>, transform_indices = @transform_4, window_bounds = array<i64: 1, 1>}, {transform_indices = @transform_5, window_bounds = array<i64: 256, 1>}]} {
    %c0 = arith.constant 0 : index
    %c0_0 = arith.constant 0 : index
    %0 = vector.load %arg1[%c0, %c0_0] : memref<256x4xf32, #tpu.memory_space<vmem>>, vector<256x4xf32>
    %c0_1 = arith.constant 0 : index
    %c0_2 = arith.constant 0 : index
    %1 = vector.load %arg2[%c0_1, %c0_2] : memref<4x128xf32, #tpu.memory_space<vmem>>, vector<4x128xf32>
    %cst = arith.constant dense<0.000000e+00> : vector<256x128xf32>
    %2 = tpu.matmul %0, %1, %cst {dimension_numbers = #tpu.dot_dimension_numbers<[1], [0], [0], [1], [0, 0, 1, 1], [], []>} : vector<256x4xf32>, vector<4x128xf32>, vector<256x128xf32> -> vector<256x128xf32>
    %c0_3 = arith.constant 0 : index
    %c0_4 = arith.constant 0 : index
    %3 = vector.load %arg3[%c0_3, %c0_4] : memref<1x128xf32, #tpu.memory_space<vmem>>, vector<1x128xf32>
    %4 = vector.broadcast %3 : vector<1x128xf32> to vector<256x128xf32>
    %5 = arith.addf %2, %4 : vector<256x128xf32>
    %cst_5 = arith.constant 0.000000e+00 : f32
    %6 = vector.broadcast %cst_5 : f32 to vector<256x128xf32>
    %7 = arith.maximumf %5, %6 : vector<256x128xf32>
    %c0_6 = arith.constant 0 : index
    %c0_7 = arith.constant 0 : index
    %8 = vector.load %arg4[%c0_6, %c0_7] : memref<1x128xf32, #tpu.memory_space<vmem>>, vector<1x128xf32>
    %9 = vector.broadcast %8 : vector<1x128xf32> to vector<256x128xf32>
    %10 = arith.mulf %7, %9 : vector<256x128xf32>
    %cst_8 = arith.constant dense<0.000000e+00> : vector<256xf32>
    %11 = vector.multi_reduction <add>, %10, %cst_8 [1] : vector<256x128xf32> to vector<256xf32>
    %12 = vector.shape_cast %11 : vector<256xf32> to vector<256x1xf32>
    %c0_9 = arith.constant 0 : index
    %c0_10 = arith.constant 0 : index
    %13 = vector.load %arg5[%c0_9, %c0_10] : memref<1x1xf32, #tpu.memory_space<vmem>>, vector<1x1xf32>
    %14 = vector.broadcast %13 : vector<1x1xf32> to vector<256x1xf32>
    %15 = arith.addf %12, %14 : vector<256x1xf32>
    %c0_11 = arith.constant 0 : index
    %c0_12 = arith.constant 0 : index
    %16 = vector.load %arg6[%c0_11, %c0_12] : memref<256x1xf32, #tpu.memory_space<vmem>>, vector<256x1xf32>
    tpu.vector_store %arg6[%c0_11, %c0_12], %15 {strides = array<i32>} : memref<256x1xf32, #tpu.memory_space<vmem>>, vector<256x1xf32>,
    return
  }
  func.func @transform_0(%arg0: i32) -> (i32, i32) {
    %c0_i32 = arith.constant 0 : i32
    %c0_i32_0 = arith.constant 0 : i32
    return %arg0, %c0_i32 : i32, i32
  }
  func.func @transform_1(%arg0: i32) -> (i32, i32) {
    %c0_i32 = arith.constant 0 : i32
    %c0_i32_0 = arith.constant 0 : i32
    %c0_i32_1 = arith.constant 0 : i32
    return %c0_i32, %c0_i32_0 : i32, i32
  }
  func.func @transform_2(%arg0: i32) -> (i32, i32) {
    %c0_i32 = arith.constant 0 : i32
    %c0_i32_0 = arith.constant 0 : i32
    %c0_i32_1 = arith.constant 0 : i32
    return %c0_i32, %c0_i32_0 : i32, i32
  }
  func.func @transform_3(%arg0: i32) -> (i32, i32) {
    %c0_i32 = arith.constant 0 : i32
    %c0_i32_0 = arith.constant 0 : i32
    %c0_i32_1 = arith.constant 0 : i32
    return %c0_i32, %c0_i32_0 : i32, i32
  }
  func.func @transform_4(%arg0: i32) -> (i32, i32) {
    %c0_i32 = arith.constant 0 : i32
    %c0_i32_0 = arith.constant 0 : i32
    %c0_i32_1 = arith.constant 0 : i32
    return %c0_i32, %c0_i32_0 : i32, i32
  }
  func.func @transform_5(%arg0: i32) -> (i32, i32) {
    %c0_i32 = arith.constant 0 : i32
    %c0_i32_0 = arith.constant 0 : i32
    return %arg0, %c0_i32 : i32, i32
  }
}

</mosaic_0001>

<llo_original>
// kernel: vnet_forward.1
$region0: #{vnet_forward.1}
  #allocation0 [shape = 'u32[]', space=smem, size = 0x4, offset = 0x4, fixed_abs, tag = 'smem constant byte address 0x4 - core index']
  #allocation1 [shape = 'u32[72,128]{1,0:T(1,128)}', space=vmem, size = 0x9000, scoped, tag = 'internal scratch']
  #allocation2 [shape = 'f32[1,1]{1,0:T(1,128)S(1)}', space=vmem, size = 0x200, scoped, tag = 'scoped memory for vnet_forward.1']
  %s0 = inlined_call_operand.vmem [shape: f32[256,4], index: 0, kind: input, shape index: {}]
  %s1 = inlined_call_operand.vmem [shape: f32[4,128], index: 1, kind: input, shape index: {}]
  %s2 = inlined_call_operand.vmem [shape: f32[1,128], index: 2, kind: input, shape index: {}]
  %s3 = inlined_call_operand.vmem [shape: f32[1,128], index: 3, kind: input, shape index: {}]
  %s4 = inlined_call_operand.<no memory space> [shape: f32[1,1], index: 4, kind: input, shape index: {}]
  %s5 = inlined_call_operand.vmem [shape: f32[256,1], index: 5, kind: output, shape index: {}]
  %s6 = sld [smem:[#allocation0]]
  $region30: #{vnet_forward.1} parent=0
    _
  %s8 = ssub.s32 1, %s6
  %s9 = scalar_select 0, %s8, %s6
  %v10 = vstv %s4
  %11 = vst [vmem:[#allocation2] sm:$0x1] %v10
  // Predicated region
  $region2: #{vnet_forward.1} parent=0 // pred_check
    _
  $region3: #{vnet_forward.1} parent=0 // pred_check_branch
    %13 = sbr.rel (0) target = $region5
  $region4: #{vnet_forward.1} parent=0 // pred_region
    _
  $region5: #{vnet_forward.1} parent=0 // pred_fallthru
    _
  // Predicated region
  $region6: #{vnet_forward.1} parent=0 // pred_check
    _
  $region7: #{vnet_forward.1} parent=0 // pred_check_branch
    %15 = sbr.rel (0) target = $region9
  $region8: #{vnet_forward.1} parent=0 // pred_region
    _
  $region9: #{vnet_forward.1} parent=0 // pred_fallthru
    _
  // Predicated region
  $region10: #{vnet_forward.1} parent=0 // pred_check
    _
  $region11: #{vnet_forward.1} parent=0 // pred_check_branch
    %17 = sbr.rel (0) target = $region13
  $region12: #{vnet_forward.1} parent=0 // pred_region
    _
  $region13: #{vnet_forward.1} parent=0 // pred_fallthru
    _
  // Predicated region
  $region14: #{vnet_forward.1} parent=0 // pred_check
    _
  $region15: #{vnet_forward.1} parent=0 // pred_check_branch
    %19 = sbr.rel (0) target = $region17
  $region16: #{vnet_forward.1} parent=0 // pred_region
    _
  $region17: #{vnet_forward.1} parent=0 // pred_fallthru
    _
  // Predicated region
  $region18: #{vnet_forward.1} parent=0 // pred_check
    _
  $region19: #{vnet_forward.1} parent=0 // pred_check_branch
    %21 = sbr.rel (0) target = $region21
  $region20: #{vnet_forward.1} parent=0 // pred_region
    _
  $region21: #{vnet_forward.1} parent=0 // pred_fallthru
    _
  %v22 = vld [vmem:[%s0] sm:$0xff]
  %v23 = vld [vmem:[%s0 + $0x8] sm:$0xff]
  %v24 = vld [vmem:[%s0 + $0x10] sm:$0xff]
  %v25 = vld [vmem:[%s0 + $0x18] sm:$0xff]
  %v26 = vld [vmem:[%s0 + $0x20] sm:$0xff]
  %v27 = vld [vmem:[%s0 + $0x28] sm:$0xff]
  %v28 = vld [vmem:[%s0 + $0x30] sm:$0xff]
  %v29 = vld [vmem:[%s0 + $0x38] sm:$0xff]
  %v30 = vld [vmem:[%s0 + $0x40] sm:$0xff]
  %v31 = vld [vmem:[%s0 + $0x48] sm:$0xff]
  %v32 = vld [vmem:[%s0 + $0x50] sm:$0xff]
  %v33 = vld [vmem:[%s0 + $0x58] sm:$0xff]
  %v34 = vld [vmem:[%s0 + $0x60] sm:$0xff]
  %v35 = vld [vmem:[%s0 + $0x68] sm:$0xff]
  %v36 = vld [vmem:[%s0 + $0x70] sm:$0xff]
  %v37 = vld [vmem:[%s0 + $0x78] sm:$0xff]
  %v38 = vld [vmem:[%s0 + $0x80] sm:$0xff]
  %v39 = vld [vmem:[%s0 + $0x88] sm:$0xff]
  %v40 = vld [vmem:[%s0 + $0x90] sm:$0xff]
  %v41 = vld [vmem:[%s0 + $0x98] sm:$0xff]
  %v42 = vld [vmem:[%s0 + $0xa0] sm:$0xff]
  %v43 = vld [vmem:[%s0 + $0xa8] sm:$0xff]
  %v44 = vld [vmem:[%s0 + $0xb0] sm:$0xff]
  %v45 = vld [vmem:[%s0 + $0xb8] sm:$0xff]
  %v46 = vld [vmem:[%s0 + $0xc0] sm:$0xff]
  %v47 = vld [vmem:[%s0 + $0xc8] sm:$0xff]
  %v48 = vld [vmem:[%s0 + $0xd0] sm:$0xff]
  %v49 = vld [vmem:[%s0 + $0xd8] sm:$0xff]
  %v50 = vld [vmem:[%s0 + $0xe0] sm:$0xff]
  %v51 = vld [vmem:[%s0 + $0xe8] sm:$0xff]
  %v52 = vld [vmem:[%s0 + $0xf0] sm:$0xff]
  %v53 = vld [vmem:[%s0 + $0xf8] sm:$0xff]
  %v54 = vld [vmem:[%s1] sm:$0xf]
  %v55 = vld [vmem:[%s2] sm:$0x1]
  %v57 = vperm.slane %v55, 0
  %vm59 = vcmask 31744
  %v61 = vsel %vm59, %v22, 0
  %v64 = vsel %vm59, %v23, 0
  %v67 = vsel %vm59, %v24, 0
  %v70 = vsel %vm59, %v25, 0
  %v73 = vsel %vm59, %v26, 0
  %v76 = vsel %vm59, %v27, 0
  %v79 = vsel %vm59, %v28, 0
  %v82 = vsel %vm59, %v29, 0
  %v85 = vsel %vm59, %v30, 0
  %v88 = vsel %vm59, %v31, 0
  %v91 = vsel %vm59, %v32, 0
  %v94 = vsel %vm59, %v33, 0
  %v97 = vsel %vm59, %v34, 0
  %v100 = vsel %vm59, %v35, 0
  %v103 = vsel %vm59, %v36, 0
  %v106 = vsel %vm59, %v37, 0
  %v109 = vsel %vm59, %v38, 0
  %v112 = vsel %vm59, %v39, 0
  %v115 = vsel %vm59, %v40, 0
  %v118 = vsel %vm59, %v41, 0
  %v121 = vsel %vm59, %v42, 0
  %v124 = vsel %vm59, %v43, 0
  %v127 = vsel %vm59, %v44, 0
  %v130 = vsel %vm59, %v45, 0
  %v133 = vsel %vm59, %v46, 0
  %v136 = vsel %vm59, %v47, 0
  %v139 = vsel %vm59, %v48, 0
  %v142 = vsel %vm59, %v49, 0
  %v145 = vsel %vm59, %v50, 0
  %v148 = vsel %vm59, %v51, 0
  %v151 = vsel %vm59, %v52, 0
  %v154 = vsel %vm59, %v53, 0
  %vm156 = vcmask 1043456
  %v158 = vsel %vm156, %v54, 0
  %160 = vmatpush.msra.mxu0 0.0
  %161 = vmatpush.msra.mxu0 0.0
  %162 = vmatpush.msra.mxu0 0.0
  %163 = vmatpush.msra.mxu0 0.0
  %164 = vmatpush.msra.mxu0 0.0
  %165 = vmatpush.msra.mxu0 0.0
  %166 = vmatpush.msra.mxu0 0.0
  %167 = vmatpush.msra.mxu0 0.0
  %168 = vmatpush.msra.mxu0 0.0
  %169 = vmatpush.msra.mxu0 0.0
  %170 = vmatpush.msra.mxu0 0.0
  %171 = vmatpush.msra.mxu0 0.0
  %172 = vmatpush.msra.mxu0 0.0
  %173 = vmatpush.msra.mxu0 0.0
  %174 = vmatpush.msra.mxu0 0.0
  %175 = vmatpush.msra.mxu0 %v158
  %176 = vmatmul.f32.gmra.mxu0 %v61
  %v177 = vpop.f32.mrf.mxu0
  %v178 = vadd.f32 %v57, %v177
  %179 = vmatmul.f32.gmra.mxu0 %v64
  %v180 = vpop.f32.mrf.mxu0
  %v181 = vadd.f32 %v57, %v180
  %182 = vmatmul.f32.gmra.mxu0 %v67
  %v183 = vpop.f32.mrf.mxu0
  %v184 = vadd.f32 %v57, %v183
  %185 = vmatmul.f32.gmra.mxu0 %v70
  %v186 = vpop.f32.mrf.mxu0
  %v187 = vadd.f32 %v57, %v186
  %188 = vmatmul.f32.gmra.mxu0 %v73
  %v189 = vpop.f32.mrf.mxu0
  %v190 = vadd.f32 %v57, %v189
  %191 = vmatmul.f32.gmra.mxu0 %v76
  %v192 = vpop.f32.mrf.mxu0
  %v193 = vadd.f32 %v57, %v192
  %194 = vmatmul.f32.gmra.mxu0 %v79
  %v195 = vpop.f32.mrf.mxu0
  %v196 = vadd.f32 %v57, %v195
  %197 = vmatmul.f32.gmra.mxu0 %v82
  %v198 = vpop.f32.mrf.mxu0
  %v199 = vadd.f32 %v57, %v198
  %200 = vmatmul.f32.gmra.mxu0 %v85
  %v201 = vpop.f32.mrf.mxu0
  %v202 = vadd.f32 %v57, %v201
  %203 = vmatmul.f32.gmra.mxu0 %v88
  %v204 = vpop.f32.mrf.mxu0
  %v205 = vadd.f32 %v57, %v204
  %206 = vmatmul.f32.gmra.mxu0 %v91
  %v207 = vpop.f32.mrf.mxu0
  %v208 = vadd.f32 %v57, %v207
  %209 = vmatmul.f32.gmra.mxu0 %v94
  %v210 = vpop.f32.mrf.mxu0
  %v211 = vadd.f32 %v57, %v210
  %212 = vmatmul.f32.gmra.mxu0 %v97
  %v213 = vpop.f32.mrf.mxu0
  %v214 = vadd.f32 %v57, %v213
  %215 = vmatmul.f32.gmra.mxu0 %v100
  %v216 = vpop.f32.mrf.mxu0
  %v217 = vadd.f32 %v57, %v216
  %218 = vmatmul.f32.gmra.mxu0 %v103
  %v219 = vpop.f32.mrf.mxu0
  %v220 = vadd.f32 %v57, %v219
  %221 = vmatmul.f32.gmra.mxu0 %v106
  %v222 = vpop.f32.mrf.mxu0
  %v223 = vadd.f32 %v57, %v222
  %224 = vmatmul.f32.gmra.mxu0 %v109
  %v225 = vpop.f32.mrf.mxu0
  %v226 = vadd.f32 %v57, %v225
  %227 = vmatmul.f32.gmra.mxu0 %v112
  %v228 = vpop.f32.mrf.mxu0
  %v229 = vadd.f32 %v57, %v228
  %230 = vmatmul.f32.gmra.mxu0 %v115
  %v231 = vpop.f32.mrf.mxu0
  %v232 = vadd.f32 %v57, %v231
  %233 = vmatmul.f32.gmra.mxu0 %v118
  %v234 = vpop.f32.mrf.mxu0
  %v235 = vadd.f32 %v57, %v234
  %236 = vmatmul.f32.gmra.mxu0 %v121
  %v237 = vpop.f32.mrf.mxu0
  %v238 = vadd.f32 %v57, %v237
  %239 = vmatmul.f32.gmra.mxu0 %v124
  %v240 = vpop.f32.mrf.mxu0
  %v241 = vadd.f32 %v57, %v240
  %242 = vmatmul.f32.gmra.mxu0 %v127
  %v243 = vpop.f32.mrf.mxu0
  %v244 = vadd.f32 %v57, %v243
  %245 = vmatmul.f32.gmra.mxu0 %v130
  %v246 = vpop.f32.mrf.mxu0
  %v247 = vadd.f32 %v57, %v246
  %248 = vmatmul.f32.gmra.mxu0 %v133
  %v249 = vpop.f32.mrf.mxu0
  %v250 = vadd.f32 %v57, %v249
  %251 = vmatmul.f32.gmra.mxu0 %v136
  %v252 = vpop.f32.mrf.mxu0
  %v253 = vadd.f32 %v57, %v252
  %254 = vmatmul.f32.gmra.mxu0 %v139
  %v255 = vpop.f32.mrf.mxu0
  %v256 = vadd.f32 %v57, %v255
  %257 = vmatmul.f32.gmra.mxu0 %v142
  %v258 = vpop.f32.mrf.mxu0
  %v259 = vadd.f32 %v57, %v258
  %260 = vmatmul.f32.gmra.mxu0 %v145
  %v261 = vpop.f32.mrf.mxu0
  %v262 = vadd.f32 %v57, %v261
  %263 = vmatmul.f32.gmra.mxu0 %v148
  %v264 = vpop.f32.mrf.mxu0
  %v265 = vadd.f32 %v57, %v264
  %266 = vmatmul.f32.gmra.mxu0 %v151
  %v267 = vpop.f32.mrf.mxu0
  %v268 = vadd.f32 %v57, %v267
  %269 = vmatmul.f32.gmra.mxu0 %v154
  %v270 = vpop.f32.mrf.mxu0
  %v271 = vadd.f32 %v57, %v270
  %272 = vdwg.mxu0
  %v273 = vmax.f32 %v178, 0.0
  %v274 = vmax.f32 %v181, 0.0
  %v275 = vmax.f32 %v184, 0.0
  %v276 = vmax.f32 %v187, 0.0
  %v277 = vmax.f32 %v190, 0.0
  %v278 = vmax.f32 %v193, 0.0
  %v279 = vmax.f32 %v196, 0.0
  %v280 = vmax.f32 %v199, 0.0
  %v281 = vmax.f32 %v202, 0.0
  %v282 = vmax.f32 %v205, 0.0
  %v283 = vmax.f32 %v208, 0.0
  %v284 = vmax.f32 %v211, 0.0
  %v285 = vmax.f32 %v214, 0.0
  %v286 = vmax.f32 %v217, 0.0
  %v287 = vmax.f32 %v220, 0.0
  %v288 = vmax.f32 %v223, 0.0
  %v289 = vmax.f32 %v226, 0.0
  %v290 = vmax.f32 %v229, 0.0
  %v291 = vmax.f32 %v232, 0.0
  %v292 = vmax.f32 %v235, 0.0
  %v293 = vmax.f32 %v238, 0.0
  %v294 = vmax.f32 %v241, 0.0
  %v295 = vmax.f32 %v244, 0.0
  %v296 = vmax.f32 %v247, 0.0
  %v297 = vmax.f32 %v250, 0.0
  %v298 = vmax.f32 %v253, 0.0
  %v299 = vmax.f32 %v256, 0.0
  %v300 = vmax.f32 %v259, 0.0
  %v301 = vmax.f32 %v262, 0.0
  %v302 = vmax.f32 %v265, 0.0
  %v303 = vmax.f32 %v268, 0.0
  %v304 = vmax.f32 %v271, 0.0
  %v305 = vld [vmem:[%s3] sm:$0x1]
  %v307 = vperm.slane %v305, 0
  %v309 = vmul.f32 %v273, %v307
  %v310 = vmul.f32 %v274, %v307
  %v311 = vmul.f32 %v275, %v307
  %v312 = vmul.f32 %v276, %v307
  %v313 = vmul.f32 %v277, %v307
  %v314 = vmul.f32 %v278, %v307
  %v315 = vmul.f32 %v279, %v307
  %v316 = vmul.f32 %v280, %v307
  %v317 = vmul.f32 %v281, %v307
  %v318 = vmul.f32 %v282, %v307
  %v319 = vmul.f32 %v283, %v307
  %v320 = vmul.f32 %v284, %v307
  %v321 = vmul.f32 %v285, %v307
  %v322 = vmul.f32 %v286, %v307
  %v323 = vmul.f32 %v287, %v307
  %v324 = vmul.f32 %v288, %v307
  %v325 = vmul.f32 %v289, %v307
  %v326 = vmul.f32 %v290, %v307
  %v327 = vmul.f32 %v291, %v307
  %v328 = vmul.f32 %v292, %v307
  %v329 = vmul.f32 %v293, %v307
  %v330 = vmul.f32 %v294, %v307
  %v331 = vmul.f32 %v295, %v307
  %v332 = vmul.f32 %v296, %v307
  %v333 = vmul.f32 %v297, %v307
  %v334 = vmul.f32 %v298, %v307
  %v335 = vmul.f32 %v299, %v307
  %v336 = vmul.f32 %v300, %v307
  %v337 = vmul.f32 %v301, %v307
  %v338 = vmul.f32 %v302, %v307
  %v339 = vmul.f32 %v303, %v307
  %v340 = vmul.f32 %v304, %v307
  %341 = vadd.xlane.f32.xlu0 %v309
  %v342 = vpop.xlane.xlu0 %341
  %343 = vadd.xlane.f32.xlu0 %v310
  %v344 = vpop.xlane.xlu0 %343
  %345 = vadd.xlane.f32.xlu0 %v311
  %v346 = vpop.xlane.xlu0 %345
  %347 = vadd.xlane.f32.xlu0 %v312
  %v348 = vpop.xlane.xlu0 %347
  %349 = vadd.xlane.f32.xlu0 %v313
  %v350 = vpop.xlane.xlu0 %349
  %351 = vadd.xlane.f32.xlu0 %v314
  %v352 = vpop.xlane.xlu0 %351
  %353 = vadd.xlane.f32.xlu0 %v315
  %v354 = vpop.xlane.xlu0 %353
  %355 = vadd.xlane.f32.xlu0 %v316
  %v356 = vpop.xlane.xlu0 %355
  %357 = vadd.xlane.f32.xlu0 %v317
  %v358 = vpop.xlane.xlu0 %357
  %359 = vadd.xlane.f32.xlu0 %v318
  %v360 = vpop.xlane.xlu0 %359
  %361 = vadd.xlane.f32.xlu0 %v319
  %v362 = vpop.xlane.xlu0 %361
  %363 = vadd.xlane.f32.xlu0 %v320
  %v364 = vpop.xlane.xlu0 %363
  %365 = vadd.xlane.f32.xlu0 %v321
  %v366 = vpop.xlane.xlu0 %365
  %367 = vadd.xlane.f32.xlu0 %v322
  %v368 = vpop.xlane.xlu0 %367
  %369 = vadd.xlane.f32.xlu0 %v323
  %v370 = vpop.xlane.xlu0 %369
  %371 = vadd.xlane.f32.xlu0 %v324
  %v372 = vpop.xlane.xlu0 %371
  %373 = vadd.xlane.f32.xlu0 %v325
  %v374 = vpop.xlane.xlu0 %373
  %375 = vadd.xlane.f32.xlu0 %v326
  %v376 = vpop.xlane.xlu0 %375
  %377 = vadd.xlane.f32.xlu0 %v327
  %v378 = vpop.xlane.xlu0 %377
  %379 = vadd.xlane.f32.xlu0 %v328
  %v380 = vpop.xlane.xlu0 %379
  %381 = vadd.xlane.f32.xlu0 %v329
  %v382 = vpop.xlane.xlu0 %381
  %383 = vadd.xlane.f32.xlu0 %v330
  %v384 = vpop.xlane.xlu0 %383
  %385 = vadd.xlane.f32.xlu0 %v331
  %v386 = vpop.xlane.xlu0 %385
  %387 = vadd.xlane.f32.xlu0 %v332
  %v388 = vpop.xlane.xlu0 %387
  %389 = vadd.xlane.f32.xlu0 %v333
  %v390 = vpop.xlane.xlu0 %389
  %391 = vadd.xlane.f32.xlu0 %v334
  %v392 = vpop.xlane.xlu0 %391
  %393 = vadd.xlane.f32.xlu0 %v335
  %v394 = vpop.xlane.xlu0 %393
  %395 = vadd.xlane.f32.xlu0 %v336
  %v396 = vpop.xlane.xlu0 %395
  %397 = vadd.xlane.f32.xlu0 %v337
  %v398 = vpop.xlane.xlu0 %397
  %399 = vadd.xlane.f32.xlu0 %v338
  %v400 = vpop.xlane.xlu0 %399
  %401 = vadd.xlane.f32.xlu0 %v339
  %v402 = vpop.xlane.xlu0 %401
  %403 = vadd.xlane.f32.xlu0 %v340
  %v404 = vpop.xlane.xlu0 %403
  %v405 = vld [vmem:[#allocation2] sm:$0x1]
  %v407 = vperm.slane %v405, 0
  %v409 = vadd.f32 %v342, %v407
  %v410 = vadd.f32 %v344, %v407
  %v411 = vadd.f32 %v346, %v407
  %v412 = vadd.f32 %v348, %v407
  %v413 = vadd.f32 %v350, %v407
  %v414 = vadd.f32 %v352, %v407
  %v415 = vadd.f32 %v354, %v407
  %v416 = vadd.f32 %v356, %v407
  %v417 = vadd.f32 %v358, %v407
  %v418 = vadd.f32 %v360, %v407
  %v419 = vadd.f32 %v362, %v407
  %v420 = vadd.f32 %v364, %v407
  %v421 = vadd.f32 %v366, %v407
  %v422 = vadd.f32 %v368, %v407
  %v423 = vadd.f32 %v370, %v407
  %v424 = vadd.f32 %v372, %v407
  %v425 = vadd.f32 %v374, %v407
  %v426 = vadd.f32 %v376, %v407
  %v427 = vadd.f32 %v378, %v407
  %v428 = vadd.f32 %v380, %v407
  %v429 = vadd.f32 %v382, %v407
  %v430 = vadd.f32 %v384, %v407
  %v431 = vadd.f32 %v386, %v407
  %v432 = vadd.f32 %v388, %v407
  %v433 = vadd.f32 %v390, %v407
  %v434 = vadd.f32 %v392, %v407
  %v435 = vadd.f32 %v394, %v407
  %v436 = vadd.f32 %v396, %v407
  %v437 = vadd.f32 %v398, %v407
  %v438 = vadd.f32 %v400, %v407
  %v439 = vadd.f32 %v402, %v407
  %v440 = vadd.f32 %v404, %v407
  %vm441 = vcmask 7168
  %442 = vst.msk [vmem:[%s5] sm:$0xff] %vm441, %v409
  %443 = vst.msk [vmem:[%s5 + $0x8] sm:$0xff] %vm441, %v410
  %444 = vst.msk [vmem:[%s5 + $0x10] sm:$0xff] %vm441, %v411
  %445 = vst.msk [vmem:[%s5 + $0x18] sm:$0xff] %vm441, %v412
  %446 = vst.msk [vmem:[%s5 + $0x20] sm:$0xff] %vm441, %v413
  %447 = vst.msk [vmem:[%s5 + $0x28] sm:$0xff] %vm441, %v414
  %448 = vst.msk [vmem:[%s5 + $0x30] sm:$0xff] %vm441, %v415
  %449 = vst.msk [vmem:[%s5 + $0x38] sm:$0xff] %vm441, %v416
  %450 = vst.msk [vmem:[%s5 + $0x40] sm:$0xff] %vm441, %v417
  %451 = vst.msk [vmem:[%s5 + $0x48] sm:$0xff] %vm441, %v418
  %452 = vst.msk [vmem:[%s5 + $0x50] sm:$0xff] %vm441, %v419
  %453 = vst.msk [vmem:[%s5 + $0x58] sm:$0xff] %vm441, %v420
  %454 = vst.msk [vmem:[%s5 + $0x60] sm:$0xff] %vm441, %v421
  %455 = vst.msk [vmem:[%s5 + $0x68] sm:$0xff] %vm441, %v422
  %456 = vst.msk [vmem:[%s5 + $0x70] sm:$0xff] %vm441, %v423
  %457 = vst.msk [vmem:[%s5 + $0x78] sm:$0xff] %vm441, %v424
  %458 = vst.msk [vmem:[%s5 + $0x80] sm:$0xff] %vm441, %v425
  %459 = vst.msk [vmem:[%s5 + $0x88] sm:$0xff] %vm441, %v426
  %460 = vst.msk [vmem:[%s5 + $0x90] sm:$0xff] %vm441, %v427
  %461 = vst.msk [vmem:[%s5 + $0x98] sm:$0xff] %vm441, %v428
  %462 = vst.msk [vmem:[%s5 + $0xa0] sm:$0xff] %vm441, %v429
  %463 = vst.msk [vmem:[%s5 + $0xa8] sm:$0xff] %vm441, %v430
  %464 = vst.msk [vmem:[%s5 + $0xb0] sm:$0xff] %vm441, %v431
  %465 = vst.msk [vmem:[%s5 + $0xb8] sm:$0xff] %vm441, %v432
  %466 = vst.msk [vmem:[%s5 + $0xc0] sm:$0xff] %vm441, %v433
  %467 = vst.msk [vmem:[%s5 + $0xc8] sm:$0xff] %vm441, %v434
  %468 = vst.msk [vmem:[%s5 + $0xd0] sm:$0xff] %vm441, %v435
  %469 = vst.msk [vmem:[%s5 + $0xd8] sm:$0xff] %vm441, %v436
  %470 = vst.msk [vmem:[%s5 + $0xe0] sm:$0xff] %vm441, %v437
  %471 = vst.msk [vmem:[%s5 + $0xe8] sm:$0xff] %vm441, %v438
  %472 = vst.msk [vmem:[%s5 + $0xf0] sm:$0xff] %vm441, %v439
  %473 = vst.msk [vmem:[%s5 + $0xf8] sm:$0xff] %vm441, %v440
  // Predicated region
  $region22: #{vnet_forward.1} parent=0 // pred_check
    _
  $region23: #{vnet_forward.1} parent=0 // pred_check_branch
    %475 = sbr.rel (0) target = $region25
  $region24: #{vnet_forward.1} parent=0 // pred_region
    _
  $region25: #{vnet_forward.1} parent=0 // pred_fallthru
    _
  // Predicated region
  $region26: #{vnet_forward.1} parent=0 // pred_check
    _
  $region27: #{vnet_forward.1} parent=0 // pred_check_branch
    %477 = sbr.rel (0) target = $region29
  $region28: #{vnet_forward.1} parent=0 // pred_region
    _
  $region29: #{vnet_forward.1} parent=0 // pred_fallthru
    _

</llo_original>
